<compile_context>
chip_gen: v5e
topology: v5e:2x2
jax: 0.10.0
libtpu: 0.0.40
codegen_flags: <defaults>
</compile_context>

<pallas_src>
import jax
import jax.numpy as jnp
from jax import lax
from jax.experimental import pallas as pl
from jax.experimental.pallas import tpu as pltpu


_LN_EPS = 1e-5          # PyTorch LayerNorm default
_ROW_TILE_CAP = 512     # rows per grid step for large N (multiple of 128)


def _scorer_kernel(x_ref, w1_ref, b1_ref, g2_ref, sg2_ref, c_ref, o_ref):
    # Per grid step:
    #   x_ref:   (TN, H)   input rows (native dtype)
    #   w1_ref:  (H2, H)   linear1 weight, PyTorch (out, in) layout (x dtype)
    #   b1_ref:  (H2, 1)   linear1 bias (f32)
    #   g2_ref:  (H2, 1)   w2 * gamma, folded linear2/affine weights (f32)
    #   sg2_ref: (1, 1)    sum(w2 * gamma) (f32)
    #   c_ref:   (1, 1)    w2 . beta + b2 (f32)
    #   o_ref:   (1, TN)   lane-dense scores (wrapper reshapes to (N, 1))
    h2 = w1_ref.shape[0]
    inv_h2 = 1.0 / h2

    # linear1 in transposed layout: h[j, n] = sum_k W1[j, k] * x[n, k].
    # Contract the last dims of both operands (MXU, f32 accumulation).
    h = lax.dot_general(
        w1_ref[...], x_ref[...],
        dimension_numbers=(((1,), (1,)), ((), ())),
        preferred_element_type=jnp.float32,
    )                                                     # (H2, TN) f32
    h = jnp.tanh(h + b1_ref[...])                         # bias broadcast over lanes

    # LayerNorm stats over H2 (sublane axis), fused single pass.
    mean = jnp.sum(h, axis=0, keepdims=True) * inv_h2         # (1, TN)
    ex2 = jnp.sum(h * h, axis=0, keepdims=True) * inv_h2      # (1, TN)
    var = ex2 - mean * mean
    inv_std = lax.rsqrt(var + _LN_EPS)                        # EUP

    # Folded (gamma, beta, W2, b2): score = (g2.h - mean*sum(g2)) * inv_std + c
    s1 = jnp.sum(h * g2_ref[...], axis=0, keepdims=True)      # (1, TN) VPU+reduce
    score = (s1 - mean * sg2_ref[...]) * inv_std + c_ref[...]
    o_ref[...] = jnp.tanh(score).astype(o_ref.dtype)          # (1, TN) lane-dense


def hde_scorer(vec, w1, b1, gamma, beta, w2, b2, *, tile_n=None):
    """HDEScorer forward.

    vec: [N, H]; parameters in PyTorch convention:
      w1: (H2, H), b1: (H2,), gamma/beta: (H2,), w2: (1, H2), b2: (1,).
    Returns scores of shape [N, 1] (same dtype as vec).
    """
    N, H = vec.shape
    H2 = H // 2

    if tile_n is None:
        # Small N: one grid step covering everything (full-array blocks).
        # Large N: capped row tile so BlockSpec double-buffering pipelines the
        # x DMA against compute and the "parallel" axis can use both cores.
        tile_n = N if N <= _ROW_TILE_CAP else _ROW_TILE_CAP
    if N > tile_n and tile_n % 128 != 0:
        raise ValueError("tile_n must be a multiple of 128 when it tiles N")

    num_tiles = (N + tile_n - 1) // tile_n
    n_padded = num_tiles * tile_n   # output slab is lane-dense & evenly tiled

    # Fold LayerNorm affine + linear2 into per-channel weights (exact algebra):
    #   score = sum_j w2_j * (gamma_j * hn_j + beta_j) + b2
    #         = (g2 . h - mean * sum(g2)) * inv_std + (w2 . beta + b2)
    w2_flat = jnp.asarray(w2, jnp.float32).reshape(H2)
    gamma_f = jnp.asarray(gamma, jnp.float32).reshape(H2)
    beta_f = jnp.asarray(beta, jnp.float32).reshape(H2)
    b2_f = jnp.asarray(b2, jnp.float32).reshape(())

    w1_k = jnp.asarray(w1).reshape(H2, H).astype(vec.dtype)
    b1_c = jnp.asarray(b1, jnp.float32).reshape(H2, 1)
    g2_c = (w2_flat * gamma_f).reshape(H2, 1)
    sg2 = jnp.sum(w2_flat * gamma_f).reshape(1, 1)
    c = (jnp.sum(w2_flat * beta_f) + b2_f).reshape(1, 1)

    out_row = pl.pallas_call(
        _scorer_kernel,
        out_shape=jax.ShapeDtypeStruct((1, n_padded), vec.dtype),
        grid_spec=pltpu.PrefetchScalarGridSpec(
            num_scalar_prefetch=0,
            grid=(num_tiles,),
            in_specs=[
                pl.BlockSpec((tile_n, H), lambda i: (i, 0)),   # x rows (streamed)
                pl.BlockSpec((H2, H), lambda i: (0, 0)),       # W1 (resident)
                pl.BlockSpec((H2, 1), lambda i: (0, 0)),       # b1
                pl.BlockSpec((H2, 1), lambda i: (0, 0)),       # g2 = w2*gamma
                pl.BlockSpec((1, 1), lambda i: (0, 0)),        # sum(g2)
                pl.BlockSpec((1, 1), lambda i: (0, 0)),        # c = w2.beta + b2
            ],
            out_specs=pl.BlockSpec((1, tile_n), lambda i: (0, i)),
        ),
        compiler_params=pltpu.CompilerParams(
            dimension_semantics=("parallel",),
            vmem_limit_bytes=32 * 1024 * 1024,
        ),
    )(vec, w1_k, b1_c, g2_c, sg2, c)

    # Lane-dense (1, n_padded) row -> (N, 1) column expected by the module.
    return out_row[0, :N].reshape(N, 1)


def _reference(vec, w1, b1, gamma, beta, w2, b2):
    h = jnp.tanh(vec @ w1.T + b1)
    mean = jnp.mean(h, axis=-1, keepdims=True)
    var = jnp.mean((h - mean) ** 2, axis=-1, keepdims=True)
    hn = (h - mean) / jnp.sqrt(var + _LN_EPS) * gamma + beta
    return jnp.tanh(hn @ w2.T + b2)


if __name__ == "__main__":
    # NOTE: at this tiny size the call is launch-overhead bound; the kernel is
    # tuned for the general large-N case (fuse or use plain XLA for N=8).
    hidden_size = 32
    H2 = hidden_size // 2
    N = 8  # number of candidate vectors to score

    key = jax.random.PRNGKey(0)
    k_x, k_w1, k_b1, k_w2, k_b2, k_x2 = jax.random.split(key, 6)

    # Deterministic init mimicking nn.Linear default (U[-1/sqrt(fan_in), ...]).
    bound1 = 1.0 / jnp.sqrt(hidden_size)
    bound2 = 1.0 / jnp.sqrt(H2)
    w1 = jax.random.uniform(k_w1, (H2, hidden_size), jnp.float32, -bound1, bound1)
    b1 = jax.random.uniform(k_b1, (H2,), jnp.float32, -bound1, bound1)
    w2 = jax.random.uniform(k_w2, (1, H2), jnp.float32, -bound2, bound2)
    b2 = jax.random.uniform(k_b2, (1,), jnp.float32, -bound2, bound2)
    gamma = jnp.ones((H2,), jnp.float32)   # LayerNorm default init
    beta = jnp.zeros((H2,), jnp.float32)

    # Small-N path (single full-array block).
    vec = jax.random.normal(k_x, (N, hidden_size), jnp.float32)
    out = jax.block_until_ready(hde_scorer(vec, w1, b1, gamma, beta, w2, b2))
    ref = _reference(vec, w1, b1, gamma, beta, w2, b2)
    assert out.shape == (N, 1)
    assert jnp.allclose(out, ref, atol=1e-5, rtol=1e-5)

    # Tiled path (multi-step grid + padded last row-tile).
    N_big = 700
    vec_big = jax.random.normal(k_x2, (N_big, hidden_size), jnp.float32)
    out_big = jax.block_until_ready(hde_scorer(vec_big, w1, b1, gamma, beta, w2, b2))
    ref_big = _reference(vec_big, w1, b1, gamma, beta, w2, b2)
    assert out_big.shape == (N_big, 1)
    assert jnp.allclose(out_big, ref_big, atol=1e-5, rtol=1e-5)

    print("KERNEL_OK")
</pallas_src>

<mosaic_0001>
module attributes {stable_mosaic.version = 11 : i64} {
  func.func @_scorer_kernel(%arg0: i32, %arg1: memref<8x32xf32, #tpu.memory_space<vmem>>, %arg2: memref<16x32xf32, #tpu.memory_space<vmem>>, %arg3: memref<16x1xf32, #tpu.memory_space<vmem>>, %arg4: memref<16x1xf32, #tpu.memory_space<vmem>>, %arg5: memref<1x1xf32, #tpu.memory_space<vmem>>, %arg6: memref<1x1xf32, #tpu.memory_space<vmem>>, %arg7: memref<1x8xf32, #tpu.memory_space<vmem>>) attributes {dimension_semantics = [#tpu.dimension_semantics<parallel>], iteration_bounds = array<i64: 1>, scalar_prefetch = 0 : i64, scratch_operands = 0 : i64, tpu.core_type = #tpu.core_type<tc>, window_params = [{transform_indices = @transform_0, window_bounds = array<i64: 8, 32>}, {pipeline_mode = #tpu.pipeline_mode<synchronous>, transform_indices = @transform_1, window_bounds = array<i64: 16, 32>}, {pipeline_mode = #tpu.pipeline_mode<synchronous>, transform_indices = @transform_2, window_bounds = array<i64: 16, 1>}, {pipeline_mode = #tpu.pipeline_mode<synchronous>, transform_indices = @transform_3, window_bounds = array<i64: 16, 1>}, {pipeline_mode = #tpu.pipeline_mode<synchronous>, transform_indices = @transform_4, window_bounds = array<i64: 1, 1>}, {pipeline_mode = #tpu.pipeline_mode<synchronous>, transform_indices = @transform_5, window_bounds = array<i64: 1, 1>}, {transform_indices = @transform_6, window_bounds = array<i64: 1, 8>}]} {
    %c0 = arith.constant 0 : index
    %c0_0 = arith.constant 0 : index
    %0 = vector.load %arg2[%c0, %c0_0] : memref<16x32xf32, #tpu.memory_space<vmem>>, vector<16x32xf32>
    %c0_1 = arith.constant 0 : index
    %c0_2 = arith.constant 0 : index
    %1 = vector.load %arg1[%c0_1, %c0_2] : memref<8x32xf32, #tpu.memory_space<vmem>>, vector<8x32xf32>
    %cst = arith.constant dense<0.000000e+00> : vector<16x8xf32>
    %2 = tpu.matmul %0, %1, %cst {dimension_numbers = #tpu.dot_dimension_numbers<[1], [1], [0], [0], [0, 0, 1, 0], [], []>} : vector<16x32xf32>, vector<8x32xf32>, vector<16x8xf32> -> vector<16x8xf32>
    %c0_3 = arith.constant 0 : index
    %c0_4 = arith.constant 0 : index
    %3 = vector.load %arg3[%c0_3, %c0_4] : memref<16x1xf32, #tpu.memory_space<vmem>>, vector<16x1xf32>
    %4 = vector.broadcast %3 : vector<16x1xf32> to vector<16x8xf32>
    %5 = arith.addf %2, %4 : vector<16x8xf32>
    %6 = math.tanh %5 : vector<16x8xf32>
    %cst_5 = arith.constant dense<0.000000e+00> : vector<8xf32>
    %7 = vector.multi_reduction <add>, %6, %cst_5 [0] : vector<16x8xf32> to vector<8xf32>
    %8 = vector.shape_cast %7 : vector<8xf32> to vector<1x8xf32>
    %cst_6 = arith.constant 6.250000e-02 : f32
    %9 = vector.broadcast %cst_6 : f32 to vector<1x8xf32>
    %10 = arith.mulf %8, %9 : vector<1x8xf32>
    %11 = arith.mulf %6, %6 : vector<16x8xf32>
    %cst_7 = arith.constant dense<0.000000e+00> : vector<8xf32>
    %12 = vector.multi_reduction <add>, %11, %cst_7 [0] : vector<16x8xf32> to vector<8xf32>
    %13 = vector.shape_cast %12 : vector<8xf32> to vector<1x8xf32>
    %cst_8 = arith.constant 6.250000e-02 : f32
    %14 = vector.broadcast %cst_8 : f32 to vector<1x8xf32>
    %15 = arith.mulf %13, %14 : vector<1x8xf32>
    %16 = arith.mulf %10, %10 : vector<1x8xf32>
    %17 = arith.subf %15, %16 : vector<1x8xf32>
    %cst_9 = arith.constant 9.99999974E-6 : f32
    %18 = vector.broadcast %cst_9 : f32 to vector<1x8xf32>
    %19 = arith.addf %17, %18 : vector<1x8xf32>
    %20 = math.rsqrt %19 : vector<1x8xf32>
    %c0_10 = arith.constant 0 : index
    %c0_11 = arith.constant 0 : index
    %21 = vector.load %arg4[%c0_10, %c0_11] : memref<16x1xf32, #tpu.memory_space<vmem>>, vector<16x1xf32>
    %22 = vector.broadcast %21 : vector<16x1xf32> to vector<16x8xf32>
    %23 = arith.mulf %6, %22 : vector<16x8xf32>
    %cst_12 = arith.constant dense<0.000000e+00> : vector<8xf32>
    %24 = vector.multi_reduction <add>, %23, %cst_12 [0] : vector<16x8xf32> to vector<8xf32>
    %25 = vector.shape_cast %24 : vector<8xf32> to vector<1x8xf32>
    %c0_13 = arith.constant 0 : index
    %c0_14 = arith.constant 0 : index
    %26 = vector.load %arg5[%c0_13, %c0_14] : memref<1x1xf32, #tpu.memory_space<vmem>>, vector<1x1xf32>
    %27 = vector.broadcast %26 : vector<1x1xf32> to vector<1x8xf32>
    %28 = arith.mulf %10, %27 : vector<1x8xf32>
    %29 = arith.subf %25, %28 : vector<1x8xf32>
    %30 = arith.mulf %29, %20 : vector<1x8xf32>
    %c0_15 = arith.constant 0 : index
    %c0_16 = arith.constant 0 : index
    %31 = vector.load %arg6[%c0_15, %c0_16] : memref<1x1xf32, #tpu.memory_space<vmem>>, vector<1x1xf32>
    %32 = vector.broadcast %31 : vector<1x1xf32> to vector<1x8xf32>
    %33 = arith.addf %30, %32 : vector<1x8xf32>
    %34 = math.tanh %33 : vector<1x8xf32>
    %c0_17 = arith.constant 0 : index
    %c0_18 = arith.constant 0 : index
    %35 = vector.load %arg7[%c0_17, %c0_18] : memref<1x8xf32, #tpu.memory_space<vmem>>, vector<1x8xf32>
    tpu.vector_store %arg7[%c0_17, %c0_18], %34 {strides = array<i32>} : memref<1x8xf32, #tpu.memory_space<vmem>>, vector<1x8xf32>,
    return
  }
  func.func @transform_0(%arg0: i32) -> (i32, i32) {
    %c0_i32 = arith.constant 0 : i32
    %c0_i32_0 = arith.constant 0 : i32
    return %arg0, %c0_i32 : i32, i32
  }
  func.func @transform_1(%arg0: i32) -> (i32, i32) {
    %c0_i32 = arith.constant 0 : i32
    %c0_i32_0 = arith.constant 0 : i32
    %c0_i32_1 = arith.constant 0 : i32
    return %c0_i32, %c0_i32_0 : i32, i32
  }
  func.func @transform_2(%arg0: i32) -> (i32, i32) {
    %c0_i32 = arith.constant 0 : i32
    %c0_i32_0 = arith.constant 0 : i32
    %c0_i32_1 = arith.constant 0 : i32
    return %c0_i32, %c0_i32_0 : i32, i32
  }
  func.func @transform_3(%arg0: i32) -> (i32, i32) {
    %c0_i32 = arith.constant 0 : i32
    %c0_i32_0 = arith.constant 0 : i32
    %c0_i32_1 = arith.constant 0 : i32
    return %c0_i32, %c0_i32_0 : i32, i32
  }
  func.func @transform_4(%arg0: i32) -> (i32, i32) {
    %c0_i32 = arith.constant 0 : i32
    %c0_i32_0 = arith.constant 0 : i32
    %c0_i32_1 = arith.constant 0 : i32
    return %c0_i32, %c0_i32_0 : i32, i32
  }
  func.func @transform_5(%arg0: i32) -> (i32, i32) {
    %c0_i32 = arith.constant 0 : i32
    %c0_i32_0 = arith.constant 0 : i32
    %c0_i32_1 = arith.constant 0 : i32
    return %c0_i32, %c0_i32_0 : i32, i32
  }
  func.func @transform_6(%arg0: i32) -> (i32, i32) {
    %c0_i32 = arith.constant 0 : i32
    %c0_i32_0 = arith.constant 0 : i32
    return %c0_i32, %arg0 : i32, i32
  }
}

</mosaic_0001>

<llo_original>
// kernel: tpu_custom_call.1
$region0: #{tpu_custom_call.1}
  #allocation0 [shape = 'u32[]', space=smem, size = 0x4, offset = 0x4, fixed_abs, tag = 'smem constant byte address 0x4 - core index']
  #allocation1 [shape = 'u32[72,128]{1,0:T(1,128)}', space=vmem, size = 0x9000, scoped, tag = 'internal scratch']
  #allocation2 [shape = 'f32[1,1]{1,0:T(1,128)S(1)}', space=vmem, size = 0x200, scoped, tag = 'scoped memory for tpu_custom_call.1']
  #allocation3 [shape = 'f32[1,1]{1,0:T(1,128)S(1)}', space=vmem, size = 0x200, scoped, tag = 'scoped memory for tpu_custom_call.1']
  %s0 = inlined_call_operand.vmem [shape: f32[8,32], index: 0, kind: input, shape index: {}]
  %s1 = inlined_call_operand.vmem [shape: f32[16,32], index: 1, kind: input, shape index: {}]
  %s2 = inlined_call_operand.vmem [shape: f32[16,1], index: 2, kind: input, shape index: {}]
  %s3 = inlined_call_operand.vmem [shape: f32[16,1], index: 3, kind: input, shape index: {}]
  %s4 = inlined_call_operand.<no memory space> [shape: f32[1,1], index: 4, kind: input, shape index: {}]
  %s5 = inlined_call_operand.<no memory space> [shape: f32[1,1], index: 5, kind: input, shape index: {}]
  %s6 = inlined_call_operand.hbm [shape: f32[1,8], index: 6, kind: output, shape index: {}]
  %s7 = sld [smem:[#allocation0]]
  $region34: #{tpu_custom_call.1} parent=0
    _
  %s9 = ssub.s32 1, %s7
  %s10 = scalar_select 0, %s9, %s7
  %v11 = vstv %s4
  %12 = vst [vmem:[#allocation2] sm:$0x1] %v11
  %v13 = vstv %s5
  %14 = vst [vmem:[#allocation3] sm:$0x1] %v13
  $region1: #{tpu_custom_call.1} parent=0
    #allocation4 [shape = 'u8[512]{0}', space=vmem, size = 0x400, scoped, tag = 'output window, operand 0, single buffered']
    #allocation5 [shape = 's32[1]{0}', space=sflag, size = 0x4, scoped, tag = 'scoped memory for tpu_custom_call.1']
    %15 = vsyncpa [#allocation5], 0
    // Predicated region
    $region2: #{tpu_custom_call.1} parent=1 // pred_check
      _
    $region3: #{tpu_custom_call.1} parent=1 // pred_check_branch
      %17 = sbr.rel (0) target = $region5
    $region4: #{tpu_custom_call.1} parent=1 // pred_region
      _
    $region5: #{tpu_custom_call.1} parent=1 // pred_fallthru
      _
    // Predicated region
    $region6: #{tpu_custom_call.1} parent=1 // pred_check
      _
    $region7: #{tpu_custom_call.1} parent=1 // pred_check_branch
      %19 = sbr.rel (0) target = $region9
    $region8: #{tpu_custom_call.1} parent=1 // pred_region
      _
    $region9: #{tpu_custom_call.1} parent=1 // pred_fallthru
      _
    // Predicated region
    $region10: #{tpu_custom_call.1} parent=1 // pred_check
      _
    $region11: #{tpu_custom_call.1} parent=1 // pred_check_branch
      %21 = sbr.rel (0) target = $region13
    $region12: #{tpu_custom_call.1} parent=1 // pred_region
      _
    $region13: #{tpu_custom_call.1} parent=1 // pred_fallthru
      _
    // Predicated region
    $region14: #{tpu_custom_call.1} parent=1 // pred_check
      _
    $region15: #{tpu_custom_call.1} parent=1 // pred_check_branch
      %23 = sbr.rel (0) target = $region17
    $region16: #{tpu_custom_call.1} parent=1 // pred_region
      _
    $region17: #{tpu_custom_call.1} parent=1 // pred_fallthru
      _
    // Predicated region
    $region18: #{tpu_custom_call.1} parent=1 // pred_check
      _
    $region19: #{tpu_custom_call.1} parent=1 // pred_check_branch
      %25 = sbr.rel (0) target = $region21
    $region20: #{tpu_custom_call.1} parent=1 // pred_region
      _
    $region21: #{tpu_custom_call.1} parent=1 // pred_fallthru
      _
    // Predicated region
    $region22: #{tpu_custom_call.1} parent=1 // pred_check
      _
    $region23: #{tpu_custom_call.1} parent=1 // pred_check_branch
      %27 = sbr.rel (0) target = $region25
    $region24: #{tpu_custom_call.1} parent=1 // pred_region
      _
    $region25: #{tpu_custom_call.1} parent=1 // pred_fallthru
      _
    %v28 = vld [vmem:[%s1] sm:$0xff]
    %v29 = vld [vmem:[%s1 + $0x8] sm:$0xff]
    %v30 = vld [vmem:[%s0] sm:$0xff]
    %v31 = vld [vmem:[%s2] sm:$0xff]
    %v32 = vld [vmem:[%s2 + $0x8] sm:$0xff]
    %34 = vset.pattern.permute.xlu0 0
    %35 = vperm.xlu0 %34, %v31
    %v36 = vpop.permute.xlu0 %35
    %39 = vset.pattern.permute.xlu0 0
    %40 = vperm.xlu0 %39, %v32
    %v41 = vpop.permute.xlu0 %40
    %vm43 = vcmask 261120
    %v45 = vsel %vm43, %v28, 0
    %v48 = vsel %vm43, %v29, 0
    %v51 = vsel %vm43, %v30, 0
    %53 = vmatpush.xpose.msra.mxu0 0.0
    %54 = vmatpush.xpose.msra.mxu0 0.0
    %55 = vmatpush.xpose.msra.mxu0 0.0
    %56 = vmatpush.xpose.msra.mxu0 0.0
    %57 = vmatpush.xpose.msra.mxu0 0.0
    %58 = vmatpush.xpose.msra.mxu0 0.0
    %59 = vmatpush.xpose.msra.mxu0 0.0
    %60 = vmatpush.xpose.msra.mxu0 0.0
    %61 = vmatpush.xpose.msra.mxu0 0.0
    %62 = vmatpush.xpose.msra.mxu0 0.0
    %63 = vmatpush.xpose.msra.mxu0 0.0
    %64 = vmatpush.xpose.msra.mxu0 0.0
    %65 = vmatpush.xpose.msra.mxu0 0.0
    %66 = vmatpush.xpose.msra.mxu0 0.0
    %67 = vmatpush.xpose.msra.mxu0 0.0
    %68 = vmatpush.xpose.msra.mxu0 %v51
    %69 = vmatmul.f32.gmra.mxu0 %v45
    %v70 = vpop.f32.mrf.mxu0
    %v71 = vadd.f32 %v36, %v70
    %72 = vmatmul.f32.gmra.mxu0 %v48
    %v73 = vpop.f32.mrf.mxu0
    %v74 = vadd.f32 %v41, %v73
    %75 = vdwg.mxu0
    %v76 = vtanh.pop %v71
    %v77 = vtanh.pop %v74
    %vm78 = vcmask 64512
    %v79 = vsel %vm78, %v76, 0.0
    %v80 = vsel %vm78, %v77, 0.0
    %v81 = vadd.f32 %v79, %v80
    %v82 = vrot.slane %v81, 4
    %v83 = vadd.f32 %v81, %v82
    %v84 = vrot.slane %v83, 2
    %v85 = vadd.f32 %v83, %v84
    %v86 = vrot.slane %v85, 1
    %v87 = vadd.f32 %v85, %v86
    %v88 = vmul.f32 %v87, 0.0625
    %v89 = vmul.f32 %v76, %v76
    %v90 = vmul.f32 %v77, %v77
    %v91 = vsel %vm78, %v89, 0.0
    %v92 = vsel %vm78, %v90, 0.0
    %v93 = vadd.f32 %v91, %v92
    %v94 = vrot.slane %v93, 4
    %v95 = vadd.f32 %v93, %v94
    %v96 = vrot.slane %v95, 2
    %v97 = vadd.f32 %v95, %v96
    %v98 = vrot.slane %v97, 1
    %v99 = vadd.f32 %v97, %v98
    %v100 = vmul.f32 %v99, 0.0625
    %v101 = vmul.f32 %v88, %v88
    %v102 = vsub.f32 %v100, %v101
    %v103 = vadd.f32 %v102, 1e-05
    %v104 = vrsqrt.pop %v103
    %v105 = vmul.f32 %v104, %v103
    %v106 = vmul.f32 %v105, %v104
    %v107 = vmul.f32 0.5, %v106
    %v108 = vsub.f32 1.5, %v107
    %v109 = vmul.f32 %v104, %v108
    %vm110 = vweird.f32 %v103
    %vm111 = vweird.f32 %v104
    %vm112 = vmor %vm110, %vm111
    %v113 = vsel %vm112, %v104, %v109
    %v114 = vld [vmem:[%s3] sm:$0xff]
    %v115 = vld [vmem:[%s3 + $0x8] sm:$0xff]
    %117 = vset.pattern.permute.xlu0 0
    %118 = vperm.xlu0 %117, %v114
    %v119 = vpop.permute.xlu0 %118
    %122 = vset.pattern.permute.xlu0 0
    %123 = vperm.xlu0 %122, %v115
    %v124 = vpop.permute.xlu0 %123
    %v126 = vmul.f32 %v76, %v119
    %v127 = vmul.f32 %v77, %v124
    %v128 = vsel %vm78, %v126, 0.0
    %v129 = vsel %vm78, %v127, 0.0
    %v130 = vadd.f32 %v128, %v129
    %v131 = vrot.slane %v130, 4
    %v132 = vadd.f32 %v130, %v131
    %v133 = vrot.slane %v132, 2
    %v134 = vadd.f32 %v132, %v133
    %v135 = vrot.slane %v134, 1
    %v136 = vadd.f32 %v134, %v135
    %v137 = vld [vmem:[#allocation2] sm:$0x1]
    %139 = vset.pattern.permute.xlu0 0
    %140 = vperm.xlu0 %139, %v137
    %v141 = vpop.permute.xlu0 %140
    %v143 = vperm.slane %v141, 0
    %v144 = vmul.f32 %v88, %v143
    %v145 = vsub.f32 %v136, %v144
    %v146 = vmul.f32 %v145, %v113
    %v147 = vld [vmem:[#allocation3] sm:$0x1]
    %149 = vset.pattern.permute.xlu0 0
    %150 = vperm.xlu0 %149, %v147
    %v151 = vpop.permute.xlu0 %150
    %v153 = vperm.slane %v151, 0
    %v154 = vadd.f32 %v146, %v153
    %v155 = vtanh.pop %v154
    %vm156 = vcmask 57344
    %157 = vst.msk [vmem:[#allocation4] sm:$0x1] %vm156, %v155
    // Predicated region
    $region26: #{tpu_custom_call.1} parent=1 // pred_check
      _
    $region27: #{tpu_custom_call.1} parent=1 // pred_check_branch
      %159 = sbr.rel (0) target = $region29
    $region28: #{tpu_custom_call.1} parent=1 // pred_region
      %161 = vsyncadd [#allocation5], 0
      %s163 = sshll.u32 [#allocation4], 4
      %s164 = int_to_ptr.vmem [resolvable:$true] %s163
      %s165 = sshll.u32 %s6, 4
      %s166 = int_to_ptr.hbm [resolvable:$true] %s165
      %168 = dma.vmem_to_hbm [thread:$0]  %s164, 16, %s166, [#allocation5]
    $region29: #{tpu_custom_call.1} parent=1 // pred_fallthru
      _
    // Predicated region
    $region30: #{tpu_custom_call.1} parent=1 // pred_check
      _
    $region31: #{tpu_custom_call.1} parent=1 // pred_check_branch
      %170 = sbr.rel (0) target = $region33
    $region32: #{tpu_custom_call.1} parent=1 // pred_region
      %172 = dma.done [#allocation5], 16
    $region33: #{tpu_custom_call.1} parent=1 // pred_fallthru
      _
    %173 = vsyncpa [#allocation5], 1

</llo_original>
